<compile_context>
chip_gen: v7x
topology: tpu7x:2x2x1
jax: 0.10.0
libtpu: 0.0.40
codegen_flags: <defaults>
</compile_context>

<pallas_src>
import jax
import jax.numpy as jnp
import numpy as np
from jax.experimental import pallas as pl
from jax.experimental.pallas import tpu as pltpu


# ----------------------------------------------------------------------------
# Fused kernel (single invocation, whole forward pass, all batches)
# ----------------------------------------------------------------------------
def _build_fused_kernel(batch, dims):
    """dims: tuple of (H, W, Cin, Cout, a) per MAvlayer (all static)."""
    n_layers = len(dims)

    def kernel(*refs):
        x_ref = refs[0]                        # [B*Hp0, a0*W0, C0] view of the NHWC input
        w_refs = refs[1:1 + n_layers]          # bf16 [Cin_i, Cout_i] folded weights
        o_ref = refs[1 + n_layers]             # tokens output
        scratch = refs[2 + n_layers:]          # one VMEM buffer per non-first layer

        def pool_sum(ref, W, Wp, a):
            # AvgPool2d(a, a) as a^2 strided reads summed in vregs.  `ref` is a
            # [B*Hp, a*W, C] view (h = hp*a + dh), so the pooling window of output
            # token (b, hp, wp) lives at middle index dh*W + wp*a + dw: for each
            # (dh, dw) this is one stride-`a` read on the sublane axis.  Requires
            # W % a == 0 (asserted in the wrapper); 1/a^2 is folded into the weight.
            acc = None
            for dh in range(a):
                for dw in range(a):
                    v = ref[:, pl.ds(dh * W + dw, Wp, a), :]   # [B*Hp, Wp, C]
                    acc = v if acc is None else acc + v
            return acc

        # ---- layer 0: pool straight from the input ref, then pointwise matmul ----
        H, W, Cin, Cout, a = dims[0]
        Hp, Wp = H // a, W // a
        p3 = pool_sum(x_ref, W, Wp, a)                          # [B*Hp, Wp, Cin]
        # merge (b, hp, wp) rows; Wp0 is a multiple of 8 here so this is layout-trivial
        y = jnp.dot(p3.reshape(batch * Hp * Wp, Cin).astype(jnp.bfloat16),
                    w_refs[0][...], preferred_element_type=jnp.float32)

        # ---- layers 1..n-1: pointwise conv commuted BEFORE the pool (both linear) ----
        for li in range(1, n_layers):
            H, W, Cin, Cout, a = dims[li]        # H, W == previous layer's (Hp, Wp)
            Hp, Wp = H // a, W // a
            # conv at the un-pooled resolution, chained on register values (bf16 MXU)
            z = jnp.dot(y.astype(jnp.bfloat16), w_refs[li][...],
                        preferred_element_type=jnp.float32)     # [B*H*W, Cout]
            buf = scratch[li - 1]                               # [B*Hp, a*W, Cout]
            buf[...] = z.reshape(buf.shape)                     # pure leading-dim regroup
            p3 = pool_sum(buf, W, Wp, a)                        # [B*Hp, Wp, Cout]
            if li + 1 < n_layers:
                # only needed for 3+ layer configs (may repack sublanes if Wp % 8 != 0)
                y = p3.reshape(batch * Hp * Wp, Cout)

        # ---- epilogue: tokens only, single store (uni concat done by the XLA wrapper) ----
        if n_layers == 1:
            o_ref[...] = y.astype(o_ref.dtype)
        else:
            o_ref[...] = p3.astype(o_ref.dtype)

    return kernel


def fused_mattp_vit_tokens(x_nhwc, w_effs, dims):
    """All MAvlayer main layers fused in one pallas_call; returns tokens [B, L, C_last]."""
    B, H0, W0, C0 = x_nhwc.shape
    n_layers = len(dims)
    Hl, Wl, _, Cl, al = dims[-1]
    Hpl, Wpl = Hl // al, Wl // al
    L_last = Hpl * Wpl

    a0 = dims[0][4]
    # layer-0 pooling view: [B*Hp0, a0*W0, C0] (free metadata reshape; h = hp*a0 + dh)
    x_view = x_nhwc.reshape(B * (H0 // a0), a0 * W0, C0)

    # per non-first layer: un-pooled conv output, laid out as the pooling view of that layer
    scratch_shapes = []
    for li in range(1, n_layers):
        H, W, _, Cout, a = dims[li]
        scratch_shapes.append(pltpu.VMEM((B * (H // a), a * W, Cout), jnp.float32))

    if n_layers == 1:
        out_shape = jax.ShapeDtypeStruct((B * L_last, Cl), jnp.float32)
    else:
        out_shape = jax.ShapeDtypeStruct((B * Hpl, Wpl, Cl), jnp.float32)

    kernel = _build_fused_kernel(B, tuple(dims))
    out = pl.pallas_call(
        kernel,
        out_shape=out_shape,
        scratch_shapes=scratch_shapes,
        # no grid: single invocation, all KB-scale operands resident in VMEM
    )(x_view, *w_effs)
    return out.reshape(B, L_last, Cl)


# ----------------------------------------------------------------------------
# Module-level wrapper
# ----------------------------------------------------------------------------
def mattp_vit_forward(x_nchw, layer_params, uni_info):
    """MATTP_ViT.forward with MAvlayer main layers and tail_trans_cfg=None."""
    B, C, H, W = x_nchw.shape
    # NCHW -> NHWC once at the boundary (token order matches torch reshape+permute)
    x_nhwc = jnp.transpose(x_nchw, (0, 2, 3, 1))
    w_effs, dims = [], []
    Hc, Wc, Cc = H, W, C
    for (dw, pw, a) in layer_params:
        # strided-read pooling and the flattened (hp, dh, w) views assume exact divisibility
        assert Hc % a == 0 and Wc % a == 0, "AvgPool2d window must divide spatial dims"
        Cout = pw.shape[1]
        # fold depthwise 1x1 scale and the 1/(a*a) pooling average into the pointwise weight
        w_effs.append(((dw[:, None] * pw) / float(a * a)).astype(jnp.bfloat16))
        dims.append((Hc, Wc, Cc, Cout, a))
        Hc, Wc, Cc = Hc // a, Wc // a, Cout

    tokens = fused_mattp_vit_tokens(x_nhwc, w_effs, dims)           # [B, L, C_last]
    # torch.cat([uni_info.repeat(B,1,1), tokens], dim=1): trivial broadcast+concat in XLA
    uni = jnp.broadcast_to(uni_info, (B, uni_info.shape[1], Cc))
    return jnp.concatenate([uni, tokens], axis=1)


def reference_forward(x_nchw, layer_params, uni_info):
    """Pure-JAX f32 reference mirroring the PyTorch NCHW semantics."""
    x = x_nchw
    for (dw, pw, a) in layer_params:
        B, C, H, W = x.shape
        x = x.reshape(B, C, H // a, a, W // a, a).mean(axis=(3, 5))      # AvgPool2d
        x = x * dw[None, :, None, None]                                  # depthwise 1x1
        x = jnp.einsum("bchw,cd->bdhw", x, pw,
                       precision=jax.lax.Precision.HIGHEST)              # pointwise 1x1
    B, C, H, W = x.shape
    tokens = jnp.transpose(x.reshape(B, C, H * W), (0, 2, 1))
    uni = jnp.broadcast_to(uni_info, (B, uni_info.shape[1], C))
    return jnp.concatenate([uni, tokens], axis=1)


# ----------------------------------------------------------------------------
if __name__ == "__main__":
    key = jax.random.PRNGKey(0)
    kx, k1, k2, k3, k4, k5 = jax.random.split(key, 6)

    # input: [b, c, w, h] NCHW
    B, C0, H0, W0 = 2, 4, 16, 16
    x_nchw = jax.random.normal(kx, (B, C0, H0, W0), jnp.float32)

    # cfg: two MAvlayer layers:
    #   LayerCfg(inc=4,  outc=16, kernel_size=1, stride=1, layer='SeparableConv2d', avg_size=2)
    #   LayerCfg(inc=16, outc=32, kernel_size=1, stride=1, layer='SeparableConv2d', avg_size=2)
    dw0 = jax.random.normal(k1, (4,), jnp.float32) * 0.5
    pw0 = jax.random.normal(k2, (4, 16), jnp.float32) / np.sqrt(4.0)
    dw1 = jax.random.normal(k3, (16,), jnp.float32) * 0.5
    pw1 = jax.random.normal(k4, (16, 32), jnp.float32) / np.sqrt(16.0)
    layer_params = [(dw0, pw0, 2), (dw1, pw1, 2)]

    # self.uni_info = nn.Parameter(torch.randn(1, 2, cfg[-1].outc))
    uni_info = jax.random.normal(k5, (1, 2, 32), jnp.float32)

    out = jax.block_until_ready(mattp_vit_forward(x_nchw, layer_params, uni_info))
    ref = jax.block_until_ready(reference_forward(x_nchw, layer_params, uni_info))

    assert out.shape == (B, 2 + 4 * 4, 32), out.shape          # [2, 18, 32]
    # bf16 MXU operands vs a float32 HIGHEST-precision reference: allow ~2^-8
    # relative operand rounding -> 2e-2 tolerance.
    assert np.allclose(np.asarray(out), np.asarray(ref), rtol=2e-2, atol=2e-2)
    print("KERNEL_OK")
</pallas_src>

<mosaic_0001>
module attributes {stable_mosaic.version = 11 : i64} {
  func.func @kernel(%arg0: memref<16x32x4xf32, #tpu.memory_space<vmem>>, %arg1: memref<4x16xbf16, #tpu.memory_space<vmem>>, %arg2: memref<16x32xbf16, #tpu.memory_space<vmem>>, %arg3: memref<8x4x32xf32, #tpu.memory_space<vmem>>, %arg4: memref<8x16x32xf32, #tpu.memory_space<vmem>>) attributes {dimension_semantics = [], scalar_prefetch = 0 : i64, scratch_operands = 1 : i64, tpu.core_type = #tpu.core_type<tc>} {
    %c0 = arith.constant 0 : index
    %c0_0 = arith.constant 0 : index
    %c0_1 = arith.constant 0 : index
    %0 = tpu.strided_load %arg0[%c0, %c0_0, %c0_1] {strides = array<i32: 1, 2, 1>} : memref<16x32x4xf32, #tpu.memory_space<vmem>>, vector<16x8x4xf32>
    %c0_2 = arith.constant 0 : index
    %c1 = arith.constant 1 : index
    %c0_3 = arith.constant 0 : index
    %1 = tpu.strided_load %arg0[%c0_2, %c1, %c0_3] {strides = array<i32: 1, 2, 1>} : memref<16x32x4xf32, #tpu.memory_space<vmem>>, vector<16x8x4xf32>
    %2 = arith.addf %0, %1 : vector<16x8x4xf32>
    %c0_4 = arith.constant 0 : index
    %c16 = arith.constant 16 : index
    %c0_5 = arith.constant 0 : index
    %3 = tpu.strided_load %arg0[%c0_4, %c16, %c0_5] {strides = array<i32: 1, 2, 1>} : memref<16x32x4xf32, #tpu.memory_space<vmem>>, vector<16x8x4xf32>
    %4 = arith.addf %2, %3 : vector<16x8x4xf32>
    %c0_6 = arith.constant 0 : index
    %c17 = arith.constant 17 : index
    %c0_7 = arith.constant 0 : index
    %5 = tpu.strided_load %arg0[%c0_6, %c17, %c0_7] {strides = array<i32: 1, 2, 1>} : memref<16x32x4xf32, #tpu.memory_space<vmem>>, vector<16x8x4xf32>
    %6 = arith.addf %4, %5 : vector<16x8x4xf32>
    %7 = vector.shape_cast %6 : vector<16x8x4xf32> to vector<128x4xf32>
    %8 = arith.truncf %7 : vector<128x4xf32> to vector<128x4xbf16>
    %c0_8 = arith.constant 0 : index
    %c0_9 = arith.constant 0 : index
    %9 = vector.load %arg1[%c0_8, %c0_9] : memref<4x16xbf16, #tpu.memory_space<vmem>>, vector<4x16xbf16>
    %cst = arith.constant dense<0.000000e+00> : vector<128x16xf32>
    %10 = tpu.matmul %8, %9, %cst {dimension_numbers = #tpu.dot_dimension_numbers<[1], [0], [0], [1], [0, 0, 1, 1], [], []>} : vector<128x4xbf16>, vector<4x16xbf16>, vector<128x16xf32> -> vector<128x16xf32>
    %11 = arith.truncf %10 : vector<128x16xf32> to vector<128x16xbf16>
    %c0_10 = arith.constant 0 : index
    %c0_11 = arith.constant 0 : index
    %12 = vector.load %arg2[%c0_10, %c0_11] : memref<16x32xbf16, #tpu.memory_space<vmem>>, vector<16x32xbf16>
    %cst_12 = arith.constant dense<0.000000e+00> : vector<128x32xf32>
    %13 = tpu.matmul %11, %12, %cst_12 {dimension_numbers = #tpu.dot_dimension_numbers<[1], [0], [0], [1], [0, 0, 1, 1], [], []>} : vector<128x16xbf16>, vector<16x32xbf16>, vector<128x32xf32> -> vector<128x32xf32>
    %14 = vector.shape_cast %13 : vector<128x32xf32> to vector<8x16x32xf32>
    %c0_13 = arith.constant 0 : index
    %c0_14 = arith.constant 0 : index
    %c0_15 = arith.constant 0 : index
    %15 = vector.load %arg4[%c0_13, %c0_14, %c0_15] : memref<8x16x32xf32, #tpu.memory_space<vmem>>, vector<8x16x32xf32>
    tpu.vector_store %arg4[%c0_13, %c0_14, %c0_15], %14 {strides = array<i32>} : memref<8x16x32xf32, #tpu.memory_space<vmem>>, vector<8x16x32xf32>,
    %c0_16 = arith.constant 0 : index
    %c0_17 = arith.constant 0 : index
    %c0_18 = arith.constant 0 : index
    %16 = tpu.strided_load %arg4[%c0_16, %c0_17, %c0_18] {strides = array<i32: 1, 2, 1>} : memref<8x16x32xf32, #tpu.memory_space<vmem>>, vector<8x4x32xf32>
    %c0_19 = arith.constant 0 : index
    %c1_20 = arith.constant 1 : index
    %c0_21 = arith.constant 0 : index
    %17 = tpu.strided_load %arg4[%c0_19, %c1_20, %c0_21] {strides = array<i32: 1, 2, 1>} : memref<8x16x32xf32, #tpu.memory_space<vmem>>, vector<8x4x32xf32>
    %18 = arith.addf %16, %17 : vector<8x4x32xf32>
    %c0_22 = arith.constant 0 : index
    %c8 = arith.constant 8 : index
    %c0_23 = arith.constant 0 : index
    %19 = tpu.strided_load %arg4[%c0_22, %c8, %c0_23] {strides = array<i32: 1, 2, 1>} : memref<8x16x32xf32, #tpu.memory_space<vmem>>, vector<8x4x32xf32>
    %20 = arith.addf %18, %19 : vector<8x4x32xf32>
    %c0_24 = arith.constant 0 : index
    %c9 = arith.constant 9 : index
    %c0_25 = arith.constant 0 : index
    %21 = tpu.strided_load %arg4[%c0_24, %c9, %c0_25] {strides = array<i32: 1, 2, 1>} : memref<8x16x32xf32, #tpu.memory_space<vmem>>, vector<8x4x32xf32>
    %22 = arith.addf %20, %21 : vector<8x4x32xf32>
    %c0_26 = arith.constant 0 : index
    %c0_27 = arith.constant 0 : index
    %c0_28 = arith.constant 0 : index
    %23 = vector.load %arg3[%c0_26, %c0_27, %c0_28] : memref<8x4x32xf32, #tpu.memory_space<vmem>>, vector<8x4x32xf32>
    tpu.vector_store %arg3[%c0_26, %c0_27, %c0_28], %22 {strides = array<i32>} : memref<8x4x32xf32, #tpu.memory_space<vmem>>, vector<8x4x32xf32>,
    return
  }
}

</mosaic_0001>

<llo_original>
// kernel: tpu_custom_call.1
$region0: #{tpu_custom_call.1}
  #allocation0 [shape = 'u32[]', space=smem, size = 0x4, offset = 0x4, fixed_abs, tag = 'smem constant byte address 0x4 - core index']
  #allocation1 [shape = 'u32[144,128]{1,0:T(1,128)}', space=vmem, size = 0x12000, scoped, tag = 'internal scratch']
  #allocation2 [shape = 'f32[8,16,32]{2,1,0:T(8,128)}', space=vmem, size = 0x10000, scoped, tag = 'scratch operand']
  %s0 = inlined_call_operand.vmem [shape: f32[16,32,4], index: 0, kind: input, shape index: {}]
  %s1 = inlined_call_operand.vmem [shape: bf16[4,16], index: 1, kind: input, shape index: {}]
  %s2 = inlined_call_operand.vmem [shape: bf16[16,32], index: 2, kind: input, shape index: {}]
  %s3 = inlined_call_operand.hbm [shape: f32[8,4,32], index: 3, kind: output, shape index: {}]
  %s4 = sld [smem:[#allocation0]]
  $region22: #{tpu_custom_call.1} parent=0
    _
  %s6 = ssub.s32 1, %s4
  %s7 = scalar_select 0, %s6, %s4
  $region1: #{tpu_custom_call.1} parent=0
    #allocation3 [shape = 'u8[16384]{0}', space=vmem, size = 0x4000, scoped, tag = 'output window, operand 0, single buffered']
    #allocation4 [shape = 's32[1]{0}', space=sflag, size = 0x4, scoped, tag = 'scoped memory for tpu_custom_call.1']
    %8 = vsyncpa [#allocation4], 0
    // Predicated region
    $region2: #{tpu_custom_call.1} parent=1 // pred_check
      _
    $region3: #{tpu_custom_call.1} parent=1 // pred_check_branch
      %10 = sbr.rel (0) target = $region5
    $region4: #{tpu_custom_call.1} parent=1 // pred_region
      _
    $region5: #{tpu_custom_call.1} parent=1 // pred_fallthru
      _
    // Predicated region
    $region6: #{tpu_custom_call.1} parent=1 // pred_check
      _
    $region7: #{tpu_custom_call.1} parent=1 // pred_check_branch
      %12 = sbr.rel (0) target = $region9
    $region8: #{tpu_custom_call.1} parent=1 // pred_region
      _
    $region9: #{tpu_custom_call.1} parent=1 // pred_fallthru
      _
    // Predicated region
    $region10: #{tpu_custom_call.1} parent=1 // pred_check
      _
    $region11: #{tpu_custom_call.1} parent=1 // pred_check_branch
      %14 = sbr.rel (0) target = $region13
    $region12: #{tpu_custom_call.1} parent=1 // pred_region
      _
    $region13: #{tpu_custom_call.1} parent=1 // pred_fallthru
      _
    %v16 = vld [vmem:[%s0] ss:$2 sm:$0xff]
    %s17 = scalar_lea.vmem %s0, 32
    %v18 = vld [vmem:[%s17] ss:$2 sm:$0xff]
    %s19 = scalar_lea.vmem %s0, 64
    %v20 = vld [vmem:[%s19] ss:$2 sm:$0xff]
    %s21 = scalar_lea.vmem %s0, 96
    %v22 = vld [vmem:[%s21] ss:$2 sm:$0xff]
    %s23 = scalar_lea.vmem %s0, 128
    %v24 = vld [vmem:[%s23] ss:$2 sm:$0xff]
    %s25 = scalar_lea.vmem %s0, 160
    %v26 = vld [vmem:[%s25] ss:$2 sm:$0xff]
    %s27 = scalar_lea.vmem %s0, 192
    %v28 = vld [vmem:[%s27] ss:$2 sm:$0xff]
    %s29 = scalar_lea.vmem %s0, 224
    %v30 = vld [vmem:[%s29] ss:$2 sm:$0xff]
    %s31 = scalar_lea.vmem %s0, 256
    %v32 = vld [vmem:[%s31] ss:$2 sm:$0xff]
    %s33 = scalar_lea.vmem %s0, 288
    %v34 = vld [vmem:[%s33] ss:$2 sm:$0xff]
    %s35 = scalar_lea.vmem %s0, 320
    %v36 = vld [vmem:[%s35] ss:$2 sm:$0xff]
    %s37 = scalar_lea.vmem %s0, 352
    %v38 = vld [vmem:[%s37] ss:$2 sm:$0xff]
    %s39 = scalar_lea.vmem %s0, 384
    %v40 = vld [vmem:[%s39] ss:$2 sm:$0xff]
    %s41 = scalar_lea.vmem %s0, 416
    %v42 = vld [vmem:[%s41] ss:$2 sm:$0xff]
    %s43 = scalar_lea.vmem %s0, 448
    %v44 = vld [vmem:[%s43] ss:$2 sm:$0xff]
    %s45 = scalar_lea.vmem %s0, 480
    %v46 = vld [vmem:[%s45] ss:$2 sm:$0xff]
    %s47 = scalar_lea.vmem %s0, 1
    %v48 = vld [vmem:[%s47] ss:$2 sm:$0xff]
    %s49 = scalar_lea.vmem %s0, 33
    %v50 = vld [vmem:[%s49] ss:$2 sm:$0xff]
    %s51 = scalar_lea.vmem %s0, 65
    %v52 = vld [vmem:[%s51] ss:$2 sm:$0xff]
    %s53 = scalar_lea.vmem %s0, 97
    %v54 = vld [vmem:[%s53] ss:$2 sm:$0xff]
    %s55 = scalar_lea.vmem %s0, 129
    %v56 = vld [vmem:[%s55] ss:$2 sm:$0xff]
    %s57 = scalar_lea.vmem %s0, 161
    %v58 = vld [vmem:[%s57] ss:$2 sm:$0xff]
    %s59 = scalar_lea.vmem %s0, 193
    %v60 = vld [vmem:[%s59] ss:$2 sm:$0xff]
    %s61 = scalar_lea.vmem %s0, 225
    %v62 = vld [vmem:[%s61] ss:$2 sm:$0xff]
    %s63 = scalar_lea.vmem %s0, 257
    %v64 = vld [vmem:[%s63] ss:$2 sm:$0xff]
    %s65 = scalar_lea.vmem %s0, 289
    %v66 = vld [vmem:[%s65] ss:$2 sm:$0xff]
    %s67 = scalar_lea.vmem %s0, 321
    %v68 = vld [vmem:[%s67] ss:$2 sm:$0xff]
    %s69 = scalar_lea.vmem %s0, 353
    %v70 = vld [vmem:[%s69] ss:$2 sm:$0xff]
    %s71 = scalar_lea.vmem %s0, 385
    %v72 = vld [vmem:[%s71] ss:$2 sm:$0xff]
    %s73 = scalar_lea.vmem %s0, 417
    %v74 = vld [vmem:[%s73] ss:$2 sm:$0xff]
    %s75 = scalar_lea.vmem %s0, 449
    %v76 = vld [vmem:[%s75] ss:$2 sm:$0xff]
    %s77 = scalar_lea.vmem %s0, 481
    %v78 = vld [vmem:[%s77] ss:$2 sm:$0xff]
    %v79 = vadd.f32 %v16, %v48
    %v80 = vadd.f32 %v18, %v50
    %v81 = vadd.f32 %v20, %v52
    %v82 = vadd.f32 %v22, %v54
    %v83 = vadd.f32 %v24, %v56
    %v84 = vadd.f32 %v26, %v58
    %v85 = vadd.f32 %v28, %v60
    %v86 = vadd.f32 %v30, %v62
    %v87 = vadd.f32 %v32, %v64
    %v88 = vadd.f32 %v34, %v66
    %v89 = vadd.f32 %v36, %v68
    %v90 = vadd.f32 %v38, %v70
    %v91 = vadd.f32 %v40, %v72
    %v92 = vadd.f32 %v42, %v74
    %v93 = vadd.f32 %v44, %v76
    %v94 = vadd.f32 %v46, %v78
    %s95 = scalar_lea.vmem %s0, 16
    %v96 = vld [vmem:[%s95] ss:$2 sm:$0xff]
    %s97 = scalar_lea.vmem %s0, 48
    %v98 = vld [vmem:[%s97] ss:$2 sm:$0xff]
    %s99 = scalar_lea.vmem %s0, 80
    %v100 = vld [vmem:[%s99] ss:$2 sm:$0xff]
    %s101 = scalar_lea.vmem %s0, 112
    %v102 = vld [vmem:[%s101] ss:$2 sm:$0xff]
    %s103 = scalar_lea.vmem %s0, 144
    %v104 = vld [vmem:[%s103] ss:$2 sm:$0xff]
    %s105 = scalar_lea.vmem %s0, 176
    %v106 = vld [vmem:[%s105] ss:$2 sm:$0xff]
    %s107 = scalar_lea.vmem %s0, 208
    %v108 = vld [vmem:[%s107] ss:$2 sm:$0xff]
    %s109 = scalar_lea.vmem %s0, 240
    %v110 = vld [vmem:[%s109] ss:$2 sm:$0xff]
    %s111 = scalar_lea.vmem %s0, 272
    %v112 = vld [vmem:[%s111] ss:$2 sm:$0xff]
    %s113 = scalar_lea.vmem %s0, 304
    %v114 = vld [vmem:[%s113] ss:$2 sm:$0xff]
    %s115 = scalar_lea.vmem %s0, 336
    %v116 = vld [vmem:[%s115] ss:$2 sm:$0xff]
    %s117 = scalar_lea.vmem %s0, 368
    %v118 = vld [vmem:[%s117] ss:$2 sm:$0xff]
    %s119 = scalar_lea.vmem %s0, 400
    %v120 = vld [vmem:[%s119] ss:$2 sm:$0xff]
    %s121 = scalar_lea.vmem %s0, 432
    %v122 = vld [vmem:[%s121] ss:$2 sm:$0xff]
    %s123 = scalar_lea.vmem %s0, 464
    %v124 = vld [vmem:[%s123] ss:$2 sm:$0xff]
    %s125 = scalar_lea.vmem %s0, 496
    %v126 = vld [vmem:[%s125] ss:$2 sm:$0xff]
    %v127 = vadd.f32 %v79, %v96
    %v128 = vadd.f32 %v80, %v98
    %v129 = vadd.f32 %v81, %v100
    %v130 = vadd.f32 %v82, %v102
    %v131 = vadd.f32 %v83, %v104
    %v132 = vadd.f32 %v84, %v106
    %v133 = vadd.f32 %v85, %v108
    %v134 = vadd.f32 %v86, %v110
    %v135 = vadd.f32 %v87, %v112
    %v136 = vadd.f32 %v88, %v114
    %v137 = vadd.f32 %v89, %v116
    %v138 = vadd.f32 %v90, %v118
    %v139 = vadd.f32 %v91, %v120
    %v140 = vadd.f32 %v92, %v122
    %v141 = vadd.f32 %v93, %v124
    %v142 = vadd.f32 %v94, %v126
    %s143 = scalar_lea.vmem %s0, 17
    %v144 = vld [vmem:[%s143] ss:$2 sm:$0xff]
    %s145 = scalar_lea.vmem %s0, 49
    %v146 = vld [vmem:[%s145] ss:$2 sm:$0xff]
    %s147 = scalar_lea.vmem %s0, 81
    %v148 = vld [vmem:[%s147] ss:$2 sm:$0xff]
    %s149 = scalar_lea.vmem %s0, 113
    %v150 = vld [vmem:[%s149] ss:$2 sm:$0xff]
    %s151 = scalar_lea.vmem %s0, 145
    %v152 = vld [vmem:[%s151] ss:$2 sm:$0xff]
    %s153 = scalar_lea.vmem %s0, 177
    %v154 = vld [vmem:[%s153] ss:$2 sm:$0xff]
    %s155 = scalar_lea.vmem %s0, 209
    %v156 = vld [vmem:[%s155] ss:$2 sm:$0xff]
    %s157 = scalar_lea.vmem %s0, 241
    %v158 = vld [vmem:[%s157] ss:$2 sm:$0xff]
    %s159 = scalar_lea.vmem %s0, 273
    %v160 = vld [vmem:[%s159] ss:$2 sm:$0xff]
    %s161 = scalar_lea.vmem %s0, 305
    %v162 = vld [vmem:[%s161] ss:$2 sm:$0xff]
    %s163 = scalar_lea.vmem %s0, 337
    %v164 = vld [vmem:[%s163] ss:$2 sm:$0xff]
    %s165 = scalar_lea.vmem %s0, 369
    %v166 = vld [vmem:[%s165] ss:$2 sm:$0xff]
    %s167 = scalar_lea.vmem %s0, 401
    %v168 = vld [vmem:[%s167] ss:$2 sm:$0xff]
    %s169 = scalar_lea.vmem %s0, 433
    %v170 = vld [vmem:[%s169] ss:$2 sm:$0xff]
    %s171 = scalar_lea.vmem %s0, 465
    %v172 = vld [vmem:[%s171] ss:$2 sm:$0xff]
    %s173 = scalar_lea.vmem %s0, 497
    %v174 = vld [vmem:[%s173] ss:$2 sm:$0xff]
    %v175 = vadd.f32 %v127, %v144
    %v176 = vadd.f32 %v128, %v146
    %v177 = vadd.f32 %v129, %v148
    %v178 = vadd.f32 %v130, %v150
    %v179 = vadd.f32 %v131, %v152
    %v180 = vadd.f32 %v132, %v154
    %v181 = vadd.f32 %v133, %v156
    %v182 = vadd.f32 %v134, %v158
    %v183 = vadd.f32 %v135, %v160
    %v184 = vadd.f32 %v136, %v162
    %v185 = vadd.f32 %v137, %v164
    %v186 = vadd.f32 %v138, %v166
    %v187 = vadd.f32 %v139, %v168
    %v188 = vadd.f32 %v140, %v170
    %v189 = vadd.f32 %v141, %v172
    %v190 = vadd.f32 %v142, %v174
    %v191 = vpack.c.bf16 %v176, %v175
    %v192 = vpack.c.bf16 %v178, %v177
    %v193 = vpack.c.bf16 %v180, %v179
    %v194 = vpack.c.bf16 %v182, %v181
    %v195 = vpack.c.bf16 %v184, %v183
    %v196 = vpack.c.bf16 %v186, %v185
    %v197 = vpack.c.bf16 %v188, %v187
    %v198 = vpack.c.bf16 %v190, %v189
    %v199 = vld [vmem:[%s1] sm:$0x3]
    %vm200 = vcmask 31744
    %v202 = vsel %vm200, %v191, 0
    %v205 = vsel %vm200, %v192, 0
    %v208 = vsel %vm200, %v193, 0
    %v211 = vsel %vm200, %v194, 0
    %v214 = vsel %vm200, %v195, 0
    %v217 = vsel %vm200, %v196, 0
    %v220 = vsel %vm200, %v197, 0
    %v223 = vsel %vm200, %v198, 0
    %vm225 = vcmask 1041408
    %v227 = vsel %vm225, %v199, 0
    %229 = vmatprep.subr.bf16.mxu0 0
    %230 = vmatpush1.bf16.msra.mxu0 %v227
    %231 = vmatprep.subr.bf16.mxu0 0
    %232 = vmatpush1.bf16.msra.mxu0 0
    %233 = vmatprep.subr.bf16.mxu0 0
    %234 = vmatpush1.bf16.msra.mxu0 0
    %235 = vmatprep.subr.bf16.mxu0 0
    %236 = vmatpush1.bf16.msra.mxu0 0
    %237 = vmatprep.subr.bf16.mxu0 0
    %238 = vmatpush1.bf16.msra.mxu0 0
    %239 = vmatprep.subr.bf16.mxu0 0
    %240 = vmatpush1.bf16.msra.mxu0 0
    %241 = vmatprep.subr.bf16.mxu0 0
    %242 = vmatpush1.bf16.msra.mxu0 0
    %243 = vmatprep.subr.bf16.mxu0 0
    %244 = vmatpush1.bf16.msra.mxu0 0
    %245 = vmatprep.subr.bf16.mxu0 0
    %246 = vmatpush1.bf16.msra.mxu0 0
    %247 = vmatprep.subr.bf16.mxu0 0
    %248 = vmatpush1.bf16.msra.mxu0 0
    %249 = vmatprep.subr.bf16.mxu0 0
    %250 = vmatpush1.bf16.msra.mxu0 0
    %251 = vmatprep.subr.bf16.mxu0 0
    %252 = vmatpush1.bf16.msra.mxu0 0
    %253 = vmatprep.subr.bf16.mxu0 0
    %254 = vmatpush1.bf16.msra.mxu0 0
    %255 = vmatprep.subr.bf16.mxu0 0
    %256 = vmatpush1.bf16.msra.mxu0 0
    %257 = vmatprep.subr.bf16.mxu0 0
    %258 = vmatpush1.bf16.msra.mxu0 0
    %259 = vmatprep.subr.bf16.mxu0 0
    %260 = vmatpush1.bf16.msra.mxu0 0
    %261 = vmatprep.mubr.bf16.mxu0 0
    %262 = vmatmul.mubr.bf16.gmra.mrb[0].mxu0 %v202
    %v263 = vpop.f32.mrb[0].mxu0
    %v264 = vadd.f32 0.0, %v263
    %v265 = vpop.f32.mrb[0].mxu0
    %v266 = vpop.f32.mrb[0].mxu0
    %v267 = vadd.f32 0.0, %v266
    %v268 = vpop.f32.mrb[0].mxu0
    %269 = vmatprep.mubr.bf16.mxu0 0
    %270 = vmatmul.mubr.bf16.gmra.mrb[0].mxu0 %v205
    %v271 = vpop.f32.mrb[0].mxu0
    %v272 = vadd.f32 0.0, %v271
    %v273 = vpop.f32.mrb[0].mxu0
    %v274 = vpop.f32.mrb[0].mxu0
    %v275 = vadd.f32 0.0, %v274
    %v276 = vpop.f32.mrb[0].mxu0
    %277 = vmatprep.mubr.bf16.mxu0 0
    %278 = vmatmul.mubr.bf16.gmra.mrb[0].mxu0 %v208
    %v279 = vpop.f32.mrb[0].mxu0
    %v280 = vadd.f32 0.0, %v279
    %v281 = vpop.f32.mrb[0].mxu0
    %v282 = vpop.f32.mrb[0].mxu0
    %v283 = vadd.f32 0.0, %v282
    %v284 = vpop.f32.mrb[0].mxu0
    %285 = vmatprep.mubr.bf16.mxu0 0
    %286 = vmatmul.mubr.bf16.gmra.mrb[0].mxu0 %v211
    %v287 = vpop.f32.mrb[0].mxu0
    %v288 = vadd.f32 0.0, %v287
    %v289 = vpop.f32.mrb[0].mxu0
    %v290 = vpop.f32.mrb[0].mxu0
    %v291 = vadd.f32 0.0, %v290
    %v292 = vpop.f32.mrb[0].mxu0
    %293 = vmatprep.mubr.bf16.mxu0 0
    %294 = vmatmul.mubr.bf16.gmra.mrb[0].mxu0 %v214
    %v295 = vpop.f32.mrb[0].mxu0
    %v296 = vadd.f32 0.0, %v295
    %v297 = vpop.f32.mrb[0].mxu0
    %v298 = vpop.f32.mrb[0].mxu0
    %v299 = vadd.f32 0.0, %v298
    %v300 = vpop.f32.mrb[0].mxu0
    %301 = vmatprep.mubr.bf16.mxu0 0
    %302 = vmatmul.mubr.bf16.gmra.mrb[0].mxu0 %v217
    %v303 = vpop.f32.mrb[0].mxu0
    %v304 = vadd.f32 0.0, %v303
    %v305 = vpop.f32.mrb[0].mxu0
    %v306 = vpop.f32.mrb[0].mxu0
    %v307 = vadd.f32 0.0, %v306
    %v308 = vpop.f32.mrb[0].mxu0
    %309 = vmatprep.mubr.bf16.mxu0 0
    %310 = vmatmul.mubr.bf16.gmra.mrb[0].mxu0 %v220
    %v311 = vpop.f32.mrb[0].mxu0
    %v312 = vadd.f32 0.0, %v311
    %v313 = vpop.f32.mrb[0].mxu0
    %v314 = vpop.f32.mrb[0].mxu0
    %v315 = vadd.f32 0.0, %v314
    %v316 = vpop.f32.mrb[0].mxu0
    %317 = vmatprep.mubr.bf16.mxu0 0
    %318 = vmatmul.mubr.bf16.gmra.mrb[0].mxu0 %v223
    %v319 = vpop.f32.mrb[0].mxu0
    %v320 = vadd.f32 0.0, %v319
    %v321 = vpop.f32.mrb[0].mxu0
    %v322 = vpop.f32.mrb[0].mxu0
    %v323 = vadd.f32 0.0, %v322
    %v324 = vpop.f32.mrb[0].mxu0
    %325 = vdwg.mxu0
    %v326 = vpack.c.bf16 %v267, %v264
    %v327 = vpack.c.bf16 %v275, %v272
    %v328 = vpack.c.bf16 %v283, %v280
    %v329 = vpack.c.bf16 %v291, %v288
    %v330 = vpack.c.bf16 %v299, %v296
    %v331 = vpack.c.bf16 %v307, %v304
    %v332 = vpack.c.bf16 %v315, %v312
    %v333 = vpack.c.bf16 %v323, %v320
    %v334 = vld [vmem:[%s2] sm:$0xf]
    %v335 = vld [vmem:[%s2 + $0x4] sm:$0xf]
    %v338 = vunpack.c.l.b16 %v334
    %v339 = vunpack.c.l.b16 %v335
    %v340 = vpack.c.b16 %v339, %v338
    %vm342 = vcmask 130048
    %v344 = vsel %vm342, %v326, 0
    %v347 = vsel %vm342, %v327, 0
    %v350 = vsel %vm342, %v328, 0
    %v353 = vsel %vm342, %v329, 0
    %v356 = vsel %vm342, %v330, 0
    %v359 = vsel %vm342, %v331, 0
    %v362 = vsel %vm342, %v332, 0
    %v365 = vsel %vm342, %v333, 0
    %367 = vmatprep.subr.bf16.mxu0 0
    %368 = vmatpush1.bf16.msra.mxu0 %v340
    %369 = vmatprep.subr.bf16.mxu0 0
    %370 = vmatpush1.bf16.msra.mxu0 0
    %371 = vmatprep.subr.bf16.mxu0 0
    %372 = vmatpush1.bf16.msra.mxu0 0
    %373 = vmatprep.subr.bf16.mxu0 0
    %374 = vmatpush1.bf16.msra.mxu0 0
    %375 = vmatprep.subr.bf16.mxu0 0
    %376 = vmatpush1.bf16.msra.mxu0 0
    %377 = vmatprep.subr.bf16.mxu0 0
    %378 = vmatpush1.bf16.msra.mxu0 0
    %379 = vmatprep.subr.bf16.mxu0 0
    %380 = vmatpush1.bf16.msra.mxu0 0
    %381 = vmatprep.subr.bf16.mxu0 0
    %382 = vmatpush1.bf16.msra.mxu0 0
    %383 = vmatprep.subr.bf16.mxu0 0
    %384 = vmatpush1.bf16.msra.mxu0 0
    %385 = vmatprep.subr.bf16.mxu0 0
    %386 = vmatpush1.bf16.msra.mxu0 0
    %387 = vmatprep.subr.bf16.mxu0 0
    %388 = vmatpush1.bf16.msra.mxu0 0
    %389 = vmatprep.subr.bf16.mxu0 0
    %390 = vmatpush1.bf16.msra.mxu0 0
    %391 = vmatprep.subr.bf16.mxu0 0
    %392 = vmatpush1.bf16.msra.mxu0 0
    %393 = vmatprep.subr.bf16.mxu0 0
    %394 = vmatpush1.bf16.msra.mxu0 0
    %395 = vmatprep.subr.bf16.mxu0 0
    %396 = vmatpush1.bf16.msra.mxu0 0
    %397 = vmatprep.subr.bf16.mxu0 0
    %398 = vmatpush1.bf16.msra.mxu0 0
    %399 = vmatprep.mubr.bf16.mxu0 0
    %400 = vmatmul.mubr.bf16.gmra.mrb[0].mxu0 %v344
    %v401 = vpop.f32.mrb[0].mxu0
    %v402 = vadd.f32 0.0, %v401
    %v403 = vpop.f32.mrb[0].mxu0
    %v404 = vpop.f32.mrb[0].mxu0
    %v405 = vadd.f32 0.0, %v404
    %v406 = vpop.f32.mrb[0].mxu0
    %407 = vmatprep.mubr.bf16.mxu0 0
    %408 = vmatmul.mubr.bf16.gmra.mrb[0].mxu0 %v347
    %v409 = vpop.f32.mrb[0].mxu0
    %v410 = vadd.f32 0.0, %v409
    %v411 = vpop.f32.mrb[0].mxu0
    %v412 = vpop.f32.mrb[0].mxu0
    %v413 = vadd.f32 0.0, %v412
    %v414 = vpop.f32.mrb[0].mxu0
    %415 = vmatprep.mubr.bf16.mxu0 0
    %416 = vmatmul.mubr.bf16.gmra.mrb[0].mxu0 %v350
    %v417 = vpop.f32.mrb[0].mxu0
    %v418 = vadd.f32 0.0, %v417
    %v419 = vpop.f32.mrb[0].mxu0
    %v420 = vpop.f32.mrb[0].mxu0
    %v421 = vadd.f32 0.0, %v420
    %v422 = vpop.f32.mrb[0].mxu0
    %423 = vmatprep.mubr.bf16.mxu0 0
    %424 = vmatmul.mubr.bf16.gmra.mrb[0].mxu0 %v353
    %v425 = vpop.f32.mrb[0].mxu0
    %v426 = vadd.f32 0.0, %v425
    %v427 = vpop.f32.mrb[0].mxu0
    %v428 = vpop.f32.mrb[0].mxu0
    %v429 = vadd.f32 0.0, %v428
    %v430 = vpop.f32.mrb[0].mxu0
    %431 = vmatprep.mubr.bf16.mxu0 0
    %432 = vmatmul.mubr.bf16.gmra.mrb[0].mxu0 %v356
    %v433 = vpop.f32.mrb[0].mxu0
    %v434 = vadd.f32 0.0, %v433
    %v435 = vpop.f32.mrb[0].mxu0
    %v436 = vpop.f32.mrb[0].mxu0
    %v437 = vadd.f32 0.0, %v436
    %v438 = vpop.f32.mrb[0].mxu0
    %439 = vmatprep.mubr.bf16.mxu0 0
    %440 = vmatmul.mubr.bf16.gmra.mrb[0].mxu0 %v359
    %v441 = vpop.f32.mrb[0].mxu0
    %v442 = vadd.f32 0.0, %v441
    %v443 = vpop.f32.mrb[0].mxu0
    %v444 = vpop.f32.mrb[0].mxu0
    %v445 = vadd.f32 0.0, %v444
    %v446 = vpop.f32.mrb[0].mxu0
    %447 = vmatprep.mubr.bf16.mxu0 0
    %448 = vmatmul.mubr.bf16.gmra.mrb[0].mxu0 %v362
    %v449 = vpop.f32.mrb[0].mxu0
    %v450 = vadd.f32 0.0, %v449
    %v451 = vpop.f32.mrb[0].mxu0
    %v452 = vpop.f32.mrb[0].mxu0
    %v453 = vadd.f32 0.0, %v452
    %v454 = vpop.f32.mrb[0].mxu0
    %455 = vmatprep.mubr.bf16.mxu0 0
    %456 = vmatmul.mubr.bf16.gmra.mrb[0].mxu0 %v365
    %v457 = vpop.f32.mrb[0].mxu0
    %v458 = vadd.f32 0.0, %v457
    %v459 = vpop.f32.mrb[0].mxu0
    %v460 = vpop.f32.mrb[0].mxu0
    %v461 = vadd.f32 0.0, %v460
    %v462 = vpop.f32.mrb[0].mxu0
    %463 = vdwg.mxu0
    %vm464 = vcmask 261120
    %465 = vst.msk [vmem:[#allocation2] sm:$0xff] %vm464, %v402
    %466 = vst.msk [vmem:[#allocation2 + $0x8] sm:$0xff] %vm464, %v405
    %467 = vst.msk [vmem:[#allocation2 + $0x10] sm:$0xff] %vm464, %v410
    %468 = vst.msk [vmem:[#allocation2 + $0x18] sm:$0xff] %vm464, %v413
    %469 = vst.msk [vmem:[#allocation2 + $0x20] sm:$0xff] %vm464, %v418
    %470 = vst.msk [vmem:[#allocation2 + $0x28] sm:$0xff] %vm464, %v421
    %471 = vst.msk [vmem:[#allocation2 + $0x30] sm:$0xff] %vm464, %v426
    %472 = vst.msk [vmem:[#allocation2 + $0x38] sm:$0xff] %vm464, %v429
    %473 = vst.msk [vmem:[#allocation2 + $0x40] sm:$0xff] %vm464, %v434
    %474 = vst.msk [vmem:[#allocation2 + $0x48] sm:$0xff] %vm464, %v437
    %475 = vst.msk [vmem:[#allocation2 + $0x50] sm:$0xff] %vm464, %v442
    %476 = vst.msk [vmem:[#allocation2 + $0x58] sm:$0xff] %vm464, %v445
    %477 = vst.msk [vmem:[#allocation2 + $0x60] sm:$0xff] %vm464, %v450
    %478 = vst.msk [vmem:[#allocation2 + $0x68] sm:$0xff] %vm464, %v453
    %479 = vst.msk [vmem:[#allocation2 + $0x70] sm:$0xff] %vm464, %v458
    %480 = vst.msk [vmem:[#allocation2 + $0x78] sm:$0xff] %vm464, %v461
    %v481 = vld [vmem:[#allocation2] ss:$2 sm:$0xf]
    %s482 = scalar_lea.vmem [#allocation2], 16
    %v483 = vld [vmem:[%s482] ss:$2 sm:$0xf]
    %s484 = scalar_lea.vmem [#allocation2], 32
    %v485 = vld [vmem:[%s484] ss:$2 sm:$0xf]
    %s486 = scalar_lea.vmem [#allocation2], 48
    %v487 = vld [vmem:[%s486] ss:$2 sm:$0xf]
    %s488 = scalar_lea.vmem [#allocation2], 64
    %v489 = vld [vmem:[%s488] ss:$2 sm:$0xf]
    %s490 = scalar_lea.vmem [#allocation2], 80
    %v491 = vld [vmem:[%s490] ss:$2 sm:$0xf]
    %s492 = scalar_lea.vmem [#allocation2], 96
    %v493 = vld [vmem:[%s492] ss:$2 sm:$0xf]
    %s494 = scalar_lea.vmem [#allocation2], 112
    %v495 = vld [vmem:[%s494] ss:$2 sm:$0xf]
    %s496 = scalar_lea.vmem [#allocation2], 1
    %v497 = vld [vmem:[%s496] ss:$2 sm:$0xf]
    %s498 = scalar_lea.vmem [#allocation2], 17
    %v499 = vld [vmem:[%s498] ss:$2 sm:$0xf]
    %s500 = scalar_lea.vmem [#allocation2], 33
    %v501 = vld [vmem:[%s500] ss:$2 sm:$0xf]
    %s502 = scalar_lea.vmem [#allocation2], 49
    %v503 = vld [vmem:[%s502] ss:$2 sm:$0xf]
    %s504 = scalar_lea.vmem [#allocation2], 65
    %v505 = vld [vmem:[%s504] ss:$2 sm:$0xf]
    %s506 = scalar_lea.vmem [#allocation2], 81
    %v507 = vld [vmem:[%s506] ss:$2 sm:$0xf]
    %s508 = scalar_lea.vmem [#allocation2], 97
    %v509 = vld [vmem:[%s508] ss:$2 sm:$0xf]
    %s510 = scalar_lea.vmem [#allocation2], 113
    %v511 = vld [vmem:[%s510] ss:$2 sm:$0xf]
    %v512 = vadd.f32 %v481, %v497
    %v513 = vadd.f32 %v483, %v499
    %v514 = vadd.f32 %v485, %v501
    %v515 = vadd.f32 %v487, %v503
    %v516 = vadd.f32 %v489, %v505
    %v517 = vadd.f32 %v491, %v507
    %v518 = vadd.f32 %v493, %v509
    %v519 = vadd.f32 %v495, %v511
    %s520 = scalar_lea.vmem [#allocation2], 8
    %v521 = vld [vmem:[%s520] ss:$2 sm:$0xf]
    %s522 = scalar_lea.vmem [#allocation2], 24
    %v523 = vld [vmem:[%s522] ss:$2 sm:$0xf]
    %s524 = scalar_lea.vmem [#allocation2], 40
    %v525 = vld [vmem:[%s524] ss:$2 sm:$0xf]
    %s526 = scalar_lea.vmem [#allocation2], 56
    %v527 = vld [vmem:[%s526] ss:$2 sm:$0xf]
    %s528 = scalar_lea.vmem [#allocation2], 72
    %v529 = vld [vmem:[%s528] ss:$2 sm:$0xf]
    %s530 = scalar_lea.vmem [#allocation2], 88
    %v531 = vld [vmem:[%s530] ss:$2 sm:$0xf]
    %s532 = scalar_lea.vmem [#allocation2], 104
    %v533 = vld [vmem:[%s532] ss:$2 sm:$0xf]
    %s534 = scalar_lea.vmem [#allocation2], 120
    %v535 = vld [vmem:[%s534] ss:$2 sm:$0xf]
    %v536 = vadd.f32 %v512, %v521
    %v537 = vadd.f32 %v513, %v523
    %v538 = vadd.f32 %v514, %v525
    %v539 = vadd.f32 %v515, %v527
    %v540 = vadd.f32 %v516, %v529
    %v541 = vadd.f32 %v517, %v531
    %v542 = vadd.f32 %v518, %v533
    %v543 = vadd.f32 %v519, %v535
    %s544 = scalar_lea.vmem [#allocation2], 9
    %v545 = vld [vmem:[%s544] ss:$2 sm:$0xf]
    %s546 = scalar_lea.vmem [#allocation2], 25
    %v547 = vld [vmem:[%s546] ss:$2 sm:$0xf]
    %s548 = scalar_lea.vmem [#allocation2], 41
    %v549 = vld [vmem:[%s548] ss:$2 sm:$0xf]
    %s550 = scalar_lea.vmem [#allocation2], 57
    %v551 = vld [vmem:[%s550] ss:$2 sm:$0xf]
    %s552 = scalar_lea.vmem [#allocation2], 73
    %v553 = vld [vmem:[%s552] ss:$2 sm:$0xf]
    %s554 = scalar_lea.vmem [#allocation2], 89
    %v555 = vld [vmem:[%s554] ss:$2 sm:$0xf]
    %s556 = scalar_lea.vmem [#allocation2], 105
    %v557 = vld [vmem:[%s556] ss:$2 sm:$0xf]
    %s558 = scalar_lea.vmem [#allocation2], 121
    %v559 = vld [vmem:[%s558] ss:$2 sm:$0xf]
    %v560 = vadd.f32 %v536, %v545
    %v561 = vadd.f32 %v537, %v547
    %v562 = vadd.f32 %v538, %v549
    %v563 = vadd.f32 %v539, %v551
    %v564 = vadd.f32 %v540, %v553
    %v565 = vadd.f32 %v541, %v555
    %v566 = vadd.f32 %v542, %v557
    %v567 = vadd.f32 %v543, %v559
    %vm568 = vcmask 257024
    %569 = vst.msk [vmem:[#allocation3] sm:$0xf] %vm568, %v560
    %570 = vst.msk [vmem:[#allocation3 + $0x4] sm:$0xf] %vm568, %v561
    %571 = vst.msk [vmem:[#allocation3 + $0x8] sm:$0xf] %vm568, %v562
    %572 = vst.msk [vmem:[#allocation3 + $0xc] sm:$0xf] %vm568, %v563
    %573 = vst.msk [vmem:[#allocation3 + $0x10] sm:$0xf] %vm568, %v564
    %574 = vst.msk [vmem:[#allocation3 + $0x14] sm:$0xf] %vm568, %v565
    %575 = vst.msk [vmem:[#allocation3 + $0x18] sm:$0xf] %vm568, %v566
    %576 = vst.msk [vmem:[#allocation3 + $0x1c] sm:$0xf] %vm568, %v567
    // Predicated region
    $region14: #{tpu_custom_call.1} parent=1 // pred_check
      _
    $region15: #{tpu_custom_call.1} parent=1 // pred_check_branch
      %578 = sbr.rel (0) target = $region17
    $region16: #{tpu_custom_call.1} parent=1 // pred_region
      %s580 = ssub.s32 512, 512
      %581 = vsyncadd [#allocation4], %s580
      %s582 = sshll.u32 [#allocation3], 4
      %s583 = int_to_ptr.vmem [resolvable:$true] %s582
      %588 = dma.vmem_to_hbm [thread:$0]  %s583, 512, %s3, [#allocation4], 64, 64, 4
    $region17: #{tpu_custom_call.1} parent=1 // pred_fallthru
      _
    // Predicated region
    $region18: #{tpu_custom_call.1} parent=1 // pred_check
      _
    $region19: #{tpu_custom_call.1} parent=1 // pred_check_branch
      %590 = sbr.rel (0) target = $region21
    $region20: #{tpu_custom_call.1} parent=1 // pred_region
      %591 = dma.done [#allocation4], 512
    $region21: #{tpu_custom_call.1} parent=1 // pred_fallthru
      _
    %592 = vsyncpa [#allocation4], 1

</llo_original>
